<compile_context>
chip_gen: v5e
topology: v5e:2x2
jax: 0.10.0
libtpu: 0.0.40
codegen_flags: <defaults>
</compile_context>

<pallas_src>
import jax
import jax.numpy as jnp
from jax.experimental import pallas as pl
from jax.experimental.pallas import tpu as pltpu


def _embedding_kernel(ids_ref,       # SMEM (B*S,) int32  scalar-prefetched token ids
                      seg_ids_ref,   # VMEM (T, 1) int32  token-type ids for this tile
                      seg_tab_ref,   # VMEM (2, D) f32    segment embedding table
                      pos_ref,       # VMEM (T, D) f32    positional rows for this tile
                      tok_hbm_ref,   # ANY/HBM (V, D) f32 token embedding table
                      out_ref,       # VMEM (T, D) f32
                      gather_buf,    # VMEM (T, D) f32    scratch for gathered rows
                      dma_sem):      # (1,) DMA semaphore shared by the row copies
    T, D = gather_buf.shape
    V = tok_hbm_ref.shape[0]
    row0 = pl.program_id(0) * T            # first flattened (b*S + s) row of this tile

    # --- issue one row-gather DMA per token (HBM table row -> VMEM scratch row) ---
    def _start(r, carry):
        tok_id = jnp.clip(ids_ref[row0 + r], 0, V - 1)   # clamp out-of-range ids safely
        pltpu.make_async_copy(
            tok_hbm_ref.at[pl.ds(tok_id, 1), :],
            gather_buf.at[pl.ds(r, 1), :],
            dma_sem.at[0],
        ).start()
        return carry

    jax.lax.fori_loop(0, T, _start, 0)

    # --- wait for all row gathers (identical-size copies on one shared semaphore) ---
    def _wait(r, carry):
        pltpu.make_async_copy(
            tok_hbm_ref.at[pl.ds(0, 1), :],
            gather_buf.at[pl.ds(r, 1), :],
            dma_sem.at[0],
        ).wait()
        return carry

    jax.lax.fori_loop(0, T, _wait, 0)

    # --- segment embedding: 2-row table -> VPU select, broadcast over D ---
    segs = seg_ids_ref[...]                       # (T, 1) int32
    seg0 = seg_tab_ref[pl.ds(0, 1), :]            # (1, D)
    seg1 = seg_tab_ref[pl.ds(1, 1), :]            # (1, D)
    seg_emb = jnp.where(segs == 0, seg0, seg1)    # (T, D)

    out_ref[...] = (gather_buf[...] + seg_emb + pos_ref[...]).astype(out_ref.dtype)


def _pick_rows_per_tile(seq_len, max_rows=512):
    """Largest row tile that divides the sequence (keeps pos/batch tile alignment)."""
    if seq_len <= max_rows:
        return seq_len
    for t in range(max_rows, 7, -8):              # multiples of 8, descending
        if seq_len % t == 0:
            return t
    return seq_len                                # fallback: whole sequence per tile


def transformer_embedding(ids, token_type_ids, tok_table, seg_table, pos_encoding,
                          *, rows_per_tile=None):
    """Pallas forward of TransformerEmbedding (inference / eval mode).

    ids, token_type_ids: (B, S) int; tok_table: (V, D); seg_table: (2, D);
    pos_encoding: (max_len, D).  Returns (B, S, D) float32.
    """
    B, S = ids.shape
    V, D = tok_table.shape

    T = rows_per_tile or _pick_rows_per_tile(S)
    assert S % T == 0, "rows_per_tile must divide the sequence length"
    R = B * S
    num_tiles = R // T
    tiles_per_seq = S // T

    ids_flat = ids.reshape(R).astype(jnp.int32)                 # -> SMEM (scalar prefetch)
    segs_col = token_type_ids.reshape(R, 1).astype(jnp.int32)   # thin VMEM column
    pos_rows = pos_encoding[:S].astype(jnp.float32)             # (S, D), S % T == 0

    if tiles_per_seq == 1:
        pos_index_map = lambda t, ids: (0, 0)
    else:
        pos_index_map = lambda t, ids: (t % tiles_per_seq, 0)

    # Explicit VMEM budget: gather scratch + double-buffered out/pos/seg/ids blocks + slack.
    need = 5 * T * D * 4 + 4 * D * 4 + 2 * T * 4
    vmem_limit = max(16 * 1024 * 1024, min(2 * need + (2 << 20), 96 * 1024 * 1024))

    out_flat = pl.pallas_call(
        _embedding_kernel,
        out_shape=jax.ShapeDtypeStruct((R, D), jnp.float32),
        grid_spec=pltpu.PrefetchScalarGridSpec(
            num_scalar_prefetch=1,
            grid=(num_tiles,),
            in_specs=[
                pl.BlockSpec((T, 1), lambda t, ids: (t, 0)),    # token-type ids
                pl.BlockSpec((2, D), lambda t, ids: (0, 0)),    # segment table (tiny)
                pl.BlockSpec((T, D), pos_index_map),            # positional rows
                pl.BlockSpec(memory_space=pl.ANY),              # token table stays in HBM
            ],
            out_specs=pl.BlockSpec((T, D), lambda t, ids: (t, 0)),
            scratch_shapes=[
                pltpu.VMEM((T, D), jnp.float32),
                pltpu.SemaphoreType.DMA((1,)),
            ],
        ),
        compiler_params=pltpu.CompilerParams(
            dimension_semantics=("parallel",),
            vmem_limit_bytes=vmem_limit,
        ),
    )(ids_flat, segs_col, seg_table.astype(jnp.float32), pos_rows,
      tok_table.astype(jnp.float32))

    return out_flat.reshape(B, S, D)


def make_positional_encoding(model_dim, max_len):
    """Same formula as the PyTorch PositionalEncoding buffer."""
    pos = jnp.arange(max_len, dtype=jnp.float32)[:, None]          # (max_len, 1)
    _2i = jnp.arange(0, model_dim, 2, dtype=jnp.float32)           # (model_dim/2,)
    angle = pos / (10000.0 ** (_2i / model_dim))                   # (max_len, model_dim/2)
    enc = jnp.zeros((max_len, model_dim), dtype=jnp.float32)
    enc = enc.at[:, 0::2].set(jnp.sin(angle))
    enc = enc.at[:, 1::2].set(jnp.cos(angle))
    return enc


if __name__ == "__main__":
    # Small synthetic config consistent with the module's __init__.
    vocab_size = 64
    model_dim = 128
    max_len = 16
    drop_prob = 0.1          # unused at inference (Dropout == identity in eval)
    B, S = 2, 8

    key = jax.random.PRNGKey(0)
    k_tok, k_seg, k_ids, k_types = jax.random.split(key, 4)

    # Deterministic parameter init (shapes from the module's __init__).
    tok_table = jax.random.normal(k_tok, (vocab_size, model_dim), dtype=jnp.float32)
    tok_table = tok_table.at[1].set(0.0)        # padding_idx=1 -> zero row
    seg_table = jax.random.normal(k_seg, (2, model_dim), dtype=jnp.float32)
    pos_encoding = make_positional_encoding(model_dim, max_len)

    # Example inputs.
    ids = jax.random.randint(k_ids, (B, S), 0, vocab_size, dtype=jnp.int32)
    ids = ids.at[0, 3].set(1)                   # exercise the padding row
    token_type_ids = jax.random.randint(k_types, (B, S), 0, 2, dtype=jnp.int32)

    out = transformer_embedding(ids, token_type_ids, tok_table, seg_table, pos_encoding)
    out = jax.block_until_ready(out)

    # Pure-JAX reference (eval-mode forward of the PyTorch module).
    ref = tok_table[ids] + seg_table[token_type_ids] + pos_encoding[:S][None, :, :]
    assert out.shape == (B, S, model_dim)
    assert jnp.allclose(out, ref, atol=1e-5, rtol=1e-5), "mismatch vs reference"

    print("KERNEL_OK")
</pallas_src>

<mosaic_0001>
module attributes {stable_mosaic.version = 11 : i64} {
  func.func @_embedding_kernel(%arg0: i32, %arg1: memref<16xi32, #tpu.memory_space<smem>>, %arg2: memref<8x1xi32, #tpu.memory_space<vmem>>, %arg3: memref<2x128xf32, #tpu.memory_space<vmem>>, %arg4: memref<8x128xf32, #tpu.memory_space<vmem>>, %arg5: memref<64x128xf32, #tpu.memory_space<any>>, %arg6: memref<8x128xf32, #tpu.memory_space<vmem>>, %arg7: memref<8x128xf32, #tpu.memory_space<vmem>>, %arg8: memref<1x!tpu.dma_semaphore, #tpu.memory_space<semaphore_mem>>) attributes {dimension_semantics = [#tpu.dimension_semantics<parallel>], iteration_bounds = array<i64: 2>, scalar_prefetch = 1 : i64, scratch_operands = 2 : i64, tpu.core_type = #tpu.core_type<tc>, window_params = [{transform_indices = @transform_0, window_bounds = array<i64: 8, 1>}, {pipeline_mode = #tpu.pipeline_mode<synchronous>, transform_indices = @transform_1, window_bounds = array<i64: 2, 128>}, {pipeline_mode = #tpu.pipeline_mode<synchronous>, transform_indices = @transform_2, window_bounds = array<i64: 8, 128>}, {}, {transform_indices = @transform_4, window_bounds = array<i64: 8, 128>}]} {
    %c8_i32 = arith.constant 8 : i32
    %0 = arith.muli %arg0, %c8_i32 : i32
    %c0_i32 = arith.constant 0 : i32
    %c8_i32_0 = arith.constant 8 : i32
    %1 = arith.addi %c0_i32, %c8_i32_0 : i32
    %c1_i32 = arith.constant 1 : i32
    scf.for %arg9 = %c0_i32 to %1 step %c1_i32  : i32 {
      %20 = arith.addi %0, %arg9 : i32
      %21 = arith.index_cast %20 : i32 to index
      %22 = memref.load %arg1[%21] : memref<16xi32, #tpu.memory_space<smem>>
      %c0_i32_17 = arith.constant 0 : i32
      %c63_i32 = arith.constant 63 : i32
      %23 = arith.maxsi %c0_i32_17, %22 : i32
      %24 = arith.minsi %c63_i32, %23 : i32
      %c0_i32_18 = arith.constant 0 : i32
      %c0_i32_19 = arith.constant 0 : i32
      %25 = tpu.memref_slice %arg5[%24, %c0_i32_19] : memref<64x128xf32, #tpu.memory_space<any>> -> memref<1x128xf32, #tpu.memory_space<any>>
      %c0_i32_20 = arith.constant 0 : i32
      %26 = tpu.memref_slice %arg7[%arg9, %c0_i32_20] : memref<8x128xf32, #tpu.memory_space<vmem>> -> memref<1x128xf32, #tpu.memory_space<vmem>>
      %27 = tpu.memref_slice %arg8[%c0_i32_18] : memref<1x!tpu.dma_semaphore, #tpu.memory_space<semaphore_mem>> -> memref<1x!tpu.dma_semaphore, #tpu.memory_space<semaphore_mem>>
      %28 = tpu.memref_squeeze %27 : memref<1x!tpu.dma_semaphore, #tpu.memory_space<semaphore_mem>> -> memref<!tpu.dma_semaphore, #tpu.memory_space<semaphore_mem>>
      tpu.enqueue_dma source(%25 : memref<1x128xf32, #tpu.memory_space<any>>) target(%26 : memref<1x128xf32, #tpu.memory_space<vmem>>) target_semaphore(%28 : memref<!tpu.dma_semaphore, #tpu.memory_space<semaphore_mem>>)
    }
    %c8_i32_1 = arith.constant 8 : i32
    %c0_i32_2 = arith.constant 0 : i32
    %c8_i32_3 = arith.constant 8 : i32
    %2 = arith.addi %c0_i32_2, %c8_i32_3 : i32
    %c1_i32_4 = arith.constant 1 : i32
    scf.for %arg9 = %c0_i32_2 to %2 step %c1_i32_4  : i32 {
      %c0_i32_17 = arith.constant 0 : i32
      %c0_i32_18 = arith.constant 0 : i32
      %c0_i32_19 = arith.constant 0 : i32
      %20 = tpu.memref_slice %arg5[%c0_i32_18, %c0_i32_19] : memref<64x128xf32, #tpu.memory_space<any>> -> memref<1x128xf32, #tpu.memory_space<any>>
      %c0_i32_20 = arith.constant 0 : i32
      %21 = tpu.memref_slice %arg7[%arg9, %c0_i32_20] : memref<8x128xf32, #tpu.memory_space<vmem>> -> memref<1x128xf32, #tpu.memory_space<vmem>>
      %22 = tpu.memref_slice %arg8[%c0_i32_17] : memref<1x!tpu.dma_semaphore, #tpu.memory_space<semaphore_mem>> -> memref<1x!tpu.dma_semaphore, #tpu.memory_space<semaphore_mem>>
      %23 = tpu.memref_squeeze %22 : memref<1x!tpu.dma_semaphore, #tpu.memory_space<semaphore_mem>> -> memref<!tpu.dma_semaphore, #tpu.memory_space<semaphore_mem>>
      tpu.wait_dma2 semaphore(%23 : memref<!tpu.dma_semaphore, #tpu.memory_space<semaphore_mem>>) src(%20 : memref<1x128xf32, #tpu.memory_space<any>>) dst(%21 : memref<1x128xf32, #tpu.memory_space<vmem>>)
    }
    %c8_i32_5 = arith.constant 8 : i32
    %c0 = arith.constant 0 : index
    %c0_6 = arith.constant 0 : index
    %3 = vector.load %arg2[%c0, %c0_6] : memref<8x1xi32, #tpu.memory_space<vmem>>, vector<8x1xi32>
    %c0_7 = arith.constant 0 : index
    %c0_8 = arith.constant 0 : index
    %4 = vector.load %arg3[%c0_7, %c0_8] : memref<2x128xf32, #tpu.memory_space<vmem>>, vector<1x128xf32>
    %c1 = arith.constant 1 : index
    %c0_9 = arith.constant 0 : index
    %5 = vector.load %arg3[%c1, %c0_9] : memref<2x128xf32, #tpu.memory_space<vmem>>, vector<1x128xf32>
    %c0_i32_10 = arith.constant 0 : i32
    %6 = vector.broadcast %c0_i32_10 : i32 to vector<8x1xi32>
    %7 = arith.cmpi eq, %3, %6 : vector<8x1xi32>
    %8 = vector.shape_cast %7 : vector<8x1xi1> to vector<8x1xi1>
    %9 = vector.broadcast %8 : vector<8x1xi1> to vector<8x128xi1>
    %10 = vector.shape_cast %4 : vector<1x128xf32> to vector<1x128xf32>
    %11 = vector.broadcast %10 : vector<1x128xf32> to vector<8x128xf32>
    %12 = vector.shape_cast %5 : vector<1x128xf32> to vector<1x128xf32>
    %13 = vector.broadcast %12 : vector<1x128xf32> to vector<8x128xf32>
    %14 = arith.select %9, %11, %13 : vector<8x128xi1>, vector<8x128xf32>
    %c0_11 = arith.constant 0 : index
    %c0_12 = arith.constant 0 : index
    %15 = vector.load %arg7[%c0_11, %c0_12] : memref<8x128xf32, #tpu.memory_space<vmem>>, vector<8x128xf32>
    %16 = arith.addf %15, %14 : vector<8x128xf32>
    %c0_13 = arith.constant 0 : index
    %c0_14 = arith.constant 0 : index
    %17 = vector.load %arg4[%c0_13, %c0_14] : memref<8x128xf32, #tpu.memory_space<vmem>>, vector<8x128xf32>
    %18 = arith.addf %16, %17 : vector<8x128xf32>
    %c0_15 = arith.constant 0 : index
    %c0_16 = arith.constant 0 : index
    %19 = vector.load %arg6[%c0_15, %c0_16] : memref<8x128xf32, #tpu.memory_space<vmem>>, vector<8x128xf32>
    tpu.vector_store %arg6[%c0_15, %c0_16], %18 {strides = array<i32>} : memref<8x128xf32, #tpu.memory_space<vmem>>, vector<8x128xf32>,
    return
  }
  func.func @transform_0(%arg0: i32, %arg1: memref<16xi32, #tpu.memory_space<smem>>) -> (i32, i32) {
    %c0_i32 = arith.constant 0 : i32
    %c0_i32_0 = arith.constant 0 : i32
    return %arg0, %c0_i32 : i32, i32
  }
  func.func @transform_1(%arg0: i32, %arg1: memref<16xi32, #tpu.memory_space<smem>>) -> (i32, i32) {
    %c0_i32 = arith.constant 0 : i32
    %c0_i32_0 = arith.constant 0 : i32
    %c0_i32_1 = arith.constant 0 : i32
    return %c0_i32, %c0_i32_0 : i32, i32
  }
  func.func @transform_2(%arg0: i32, %arg1: memref<16xi32, #tpu.memory_space<smem>>) -> (i32, i32) {
    %c0_i32 = arith.constant 0 : i32
    %c0_i32_0 = arith.constant 0 : i32
    %c0_i32_1 = arith.constant 0 : i32
    return %c0_i32, %c0_i32_0 : i32, i32
  }
  func.func @transform_4(%arg0: i32, %arg1: memref<16xi32, #tpu.memory_space<smem>>) -> (i32, i32) {
    %c0_i32 = arith.constant 0 : i32
    %c0_i32_0 = arith.constant 0 : i32
    return %arg0, %c0_i32 : i32, i32
  }
}

</mosaic_0001>

<llo_original>
// kernel: tpu_custom_call.1
$region0: #{tpu_custom_call.1}
  #allocation0 [shape = 'u32[]', space=smem, size = 0x4, offset = 0x4, fixed_abs, tag = 'smem constant byte address 0x4 - core index']
  #allocation1 [shape = 'u32[72,128]{1,0:T(1,128)}', space=vmem, size = 0x9000, scoped, tag = 'internal scratch']
  #allocation2 [shape = 'f32[8,128]{1,0:T(8,128)}', space=vmem, size = 0x1000, scoped, tag = 'scratch operand']
  #allocation3 [shape = 's32[1]{0}', space=sflag, size = 0x4, scoped, tag = 'scratch operand']
  #allocation4 [shape = 's32[1]{0}', space=sflag, size = 0x4, scoped, tag = 'scoped memory for tpu_custom_call.1']
  #allocation5 [shape = 'u8[512]{0}', space=smem, size = 0x200, scoped, tag = 'prefetched SMEM operand 0']
  #allocation8 [shape = 's32[]', space=sflag, size = 0x4, offset = 0, fixed_abs, tag = 'sflag constant byte address 0x0 - dummy sync flag']
  #allocation9 [shape = 's32[]', space=sflag, size = 0x4, offset = 0, fixed_abs, tag = 'sflag constant byte address 0x0 - dummy sync flag']
  #allocation10 [shape = 'u32[]', space=smem, size = 0x4, offset = 0x44, fixed_abs, tag = 'smem constant byte address 0x44 - assertion arg 0']
  #allocation11 [shape = 'u32[]', space=smem, size = 0x4, offset = 0x48, fixed_abs, tag = 'smem constant byte address 0x48 - assertion arg 1']
  %s0 = inlined_call_operand.vmem [shape: s32[16], index: 0, kind: input, shape index: {}]
  %s1 = inlined_call_operand.vmem [shape: s32[16,1], index: 1, kind: input, shape index: {}]
  %s2 = inlined_call_operand.vmem [shape: f32[2,128], index: 2, kind: input, shape index: {}]
  %s3 = inlined_call_operand.vmem [shape: f32[8,128], index: 3, kind: input, shape index: {}]
  %s4 = inlined_call_operand.hbm [shape: f32[64,128], index: 4, kind: input, shape index: {}]
  %s5 = inlined_call_operand.hbm [shape: f32[16,128], index: 5, kind: output, shape index: {}]
  %s6 = sld [smem:[#allocation0]]
  $region63: #{tpu_custom_call.1} parent=0
    _
  %s8 = ssub.s32 1, %s6
  %s9 = scalar_select 0, %s8, %s6
  %s11 = sshll.u32 %s0, 4
  %s12 = int_to_ptr.vmem [resolvable:$true] %s11
  %14 = dma.vmem_to_smem %s12, 16, [#allocation5], [#allocation4]
  %16 = dma.done [#allocation4], 16
  %17 = sfence
  $region1: #{tpu_custom_call.1} parent=0
    #allocation6 [shape = 'u8[8192]{0}', space=vmem, size = 0x2000, scoped, tag = 'output window, operand 0']
    #allocation7 [shape = 's32[2]{0}', space=sflag, size = 0x8, scoped, tag = 'scoped memory for tpu_custom_call.1']
    %18 = vsyncpa [#allocation7], 0
    %s19 = scalar_lea.sflag [#allocation7], 1
    %20 = vsyncpa %s19, 0
    loop: start=0, step=1, limit=4
    $region2: #{tpu_custom_call.1} parent=1 // loop_pre_header
      _
    $region3: #{tpu_custom_call.1} parent=1 // loop_header
      %s22 = sphi 0, %s26
      %p23 = scmp.ge.s32.totalorder %s22, 4
      %s32 = sphi 0, %s34
      %s35 = sphi 0, %s32
      %s36 = sphi 0, %s35
      %s52 = sphi 0, %s36
      %s56 = sphi 0, %s56
      %s58 = sphi 0, %s56
      %s59 = sphi 0, %s58
      %s73 = sphi 0, %s59
      %s77 = sphi 0, %s77
      %s79 = sphi 0, %s77
      %s80 = sphi 0, %s79
      %s94 = sphi 0, %s80
      %s100 = sphi 0, %s102
      %s103 = sphi 0, %s100
      %s104 = sphi 0, %s103
      %s120 = sphi 0, %s104
    $region4: #{tpu_custom_call.1} parent=1 // loop_header_branch
      %25 = sbr.rel (%p23) target = $region8
    $region5: #{tpu_custom_call.1} parent=1 // loop_body
      %s27 = ssub.s32 %s22, 1
      %s28 = ssub.s32 %s22, 2
      %s29 = sadd.s32 %s22, 1
      %s30 = ssub.s32 %s22, %s29
      %p31 = scmp.eq.s32.totalorder %s30, 0
      %s33 = sadd.s32 %s32, 1
      %s34 = scalar_select %p31, %s32, %s33
      %p37 = pneg %p31
      %p38 = scmp.eq.s32.totalorder %s22, 1
      %p39 = por %p37, %p38
      %p40 = scmp.ne.s32.totalorder %s32, %s35
      %p41 = scmp.eq.s32.totalorder %s22, 0
      %p42 = por %p40, %p41
      %p43 = scmp.ne.s32.totalorder %s32, %s35
      %p44 = scmp.eq.s32.totalorder %s27, 1
      %p45 = por %p43, %p44
      %p46 = scmp.ne.s32.totalorder %s35, %s36
      %p47 = scmp.eq.s32.totalorder %s27, 0
      %p48 = por %p46, %p47
      %p49 = scmp.ne.s32.totalorder %s35, %s36
      %p50 = scmp.eq.s32.totalorder %s28, 1
      %p51 = por %p49, %p50
      %p53 = scmp.ne.s32.totalorder %s36, %s52
      %p54 = scmp.eq.s32.totalorder %s28, 0
      %p55 = por %p53, %p54
      %s57 = sadd.s32 %s56, 1
      %p60 = scmp.eq.s32.totalorder %s22, 1
      %p61 = scmp.ne.s32.totalorder %s56, %s58
      %p62 = scmp.eq.s32.totalorder %s22, 0
      %p63 = por %p61, %p62
      %p64 = scmp.ne.s32.totalorder %s56, %s58
      %p65 = scmp.eq.s32.totalorder %s27, 1
      %p66 = por %p64, %p65
      %p67 = scmp.ne.s32.totalorder %s58, %s59
      %p68 = scmp.eq.s32.totalorder %s27, 0
      %p69 = por %p67, %p68
      %p70 = scmp.ne.s32.totalorder %s58, %s59
      %p71 = scmp.eq.s32.totalorder %s28, 1
      %p72 = por %p70, %p71
      %p74 = scmp.ne.s32.totalorder %s59, %s73
      %p75 = scmp.eq.s32.totalorder %s28, 0
      %p76 = por %p74, %p75
      %s78 = sadd.s32 %s77, 1
      %p81 = scmp.eq.s32.totalorder %s22, 1
      %p82 = scmp.ne.s32.totalorder %s77, %s79
      %p83 = scmp.eq.s32.totalorder %s22, 0
      %p84 = por %p82, %p83
      %p85 = scmp.ne.s32.totalorder %s77, %s79
      %p86 = scmp.eq.s32.totalorder %s27, 1
      %p87 = por %p85, %p86
      %p88 = scmp.ne.s32.totalorder %s79, %s80
      %p89 = scmp.eq.s32.totalorder %s27, 0
      %p90 = por %p88, %p89
      %p91 = scmp.ne.s32.totalorder %s79, %s80
      %p92 = scmp.eq.s32.totalorder %s28, 1
      %p93 = por %p91, %p92
      %p95 = scmp.ne.s32.totalorder %s80, %s94
      %p96 = scmp.eq.s32.totalorder %s28, 0
      %p97 = por %p95, %p96
      %s98 = ssub.s32 %s22, %s29
      %p99 = scmp.eq.s32.totalorder %s98, 0
      %s101 = sadd.s32 %s100, 1
      %s102 = scalar_select %p99, %s100, %s101
      %p105 = pneg %p99
      %p106 = scmp.eq.s32.totalorder %s22, 1
      %p107 = por %p105, %p106
      %p108 = scmp.ne.s32.totalorder %s100, %s103
      %p109 = scmp.eq.s32.totalorder %s22, 0
      %p110 = por %p108, %p109
      %p111 = scmp.ne.s32.totalorder %s100, %s103
      %p112 = scmp.eq.s32.totalorder %s27, 1
      %p113 = por %p111, %p112
      %p114 = scmp.ne.s32.totalorder %s103, %s104
      %p115 = scmp.eq.s32.totalorder %s27, 0
      %p116 = por %p114, %p115
      %p117 = scmp.ne.s32.totalorder %s103, %s104
      %p118 = scmp.eq.s32.totalorder %s28, 1
      %p119 = por %p117, %p118
      %p121 = scmp.ne.s32.totalorder %s104, %s120
      %p122 = scmp.eq.s32.totalorder %s28, 0
      %p123 = por %p121, %p122
      %p124 = scmp.le.s32.totalorder 1, %s22
      %p125 = scmp.lt.s32.totalorder %s22, 3
      %p126 = pnand %p124, %p125
      %p127 = pneg %p126
      // Predicated region
      $region9: #{tpu_custom_call.1} parent=5 // pred_check
        _
      $region10: #{tpu_custom_call.1} parent=5 // pred_check_branch
        %129 = sbr.rel (%p126) target = $region12
      $region11: #{tpu_custom_call.1} parent=5 // pred_region
        %s130 = ssub.s32 %s22, 1
        // Predicated region
        $region13: #{tpu_custom_call.1} parent=11 // pred_check
          %p131 = pneg %p69
        $region14: #{tpu_custom_call.1} parent=11 // pred_check_branch
          %133 = sbr.rel (%p131) target = $region16
        $region15: #{tpu_custom_call.1} parent=11 // pred_region
          _
        $region16: #{tpu_custom_call.1} parent=11 // pred_fallthru
          _
        // Predicated region
        $region17: #{tpu_custom_call.1} parent=11 // pred_check
          %p134 = pneg %p90
        $region18: #{tpu_custom_call.1} parent=11 // pred_check_branch
          %136 = sbr.rel (%p134) target = $region20
        $region19: #{tpu_custom_call.1} parent=11 // pred_region
          _
        $region20: #{tpu_custom_call.1} parent=11 // pred_fallthru
          _
      $region12: #{tpu_custom_call.1} parent=5 // pred_fallthru
        _
      %p137 = scmp.lt.s32.totalorder %s22, 2
      // Predicated region
      $region21: #{tpu_custom_call.1} parent=5 // pred_check
        %p138 = pneg %p137
      $region22: #{tpu_custom_call.1} parent=5 // pred_check_branch
        %140 = sbr.rel (%p138) target = $region24
      $region23: #{tpu_custom_call.1} parent=5 // pred_region
        // Predicated region
        $region25: #{tpu_custom_call.1} parent=23 // pred_check
          %p141 = pneg %p42
        $region26: #{tpu_custom_call.1} parent=23 // pred_check_branch
          %143 = sbr.rel (%p141) target = $region28
        $region27: #{tpu_custom_call.1} parent=23 // pred_region
          %p144 = scmp.lt.s32.totalorder %s22, 1
          %s145 = scalar_select %p144, %s22, 1
          %s146 = smul.addr %s145, 8
          %s147 = scalar_lea.vmem %s1, %s146
        $region28: #{tpu_custom_call.1} parent=23 // pred_fallthru
          _
      $region24: #{tpu_custom_call.1} parent=5 // pred_fallthru
        _
      %p148 = scmp.le.s32.totalorder 1, %s22
      %p149 = scmp.lt.s32.totalorder %s22, 3
      %p150 = pnand %p148, %p149
      %p151 = pneg %p150
      // Predicated region
      $region29: #{tpu_custom_call.1} parent=5 // pred_check
        _
      $region30: #{tpu_custom_call.1} parent=5 // pred_check_branch
        %153 = sbr.rel (%p150) target = $region32
      $region31: #{tpu_custom_call.1} parent=5 // pred_region
        %s154 = ssub.s32 %s22, 1
        %p155 = scmp.lt.s32.totalorder %s27, 1
        %s156 = scalar_select %p155, %s27, 1
        %s157 = smul.addr %s156, 8
        %s158 = scalar_lea.vmem %s1, %s157
        %p159 = pneg %p48
        %p160 = pneg %p45
        %p161 = pneg %p69
        %p162 = pneg %p66
        %p163 = pneg %p90
        %p164 = pneg %p87
        %p165 = pneg %p116
        %p166 = pneg %p113
        %s167 = sand.u32 %s103, 1
        %s168 = scalar_lea.sflag [#allocation7], %s167
        %s169 = sand.u32 %s103, 1
        %s170 = smul.addr %s169, 8
        %s171 = scalar_lea.vmem [#allocation6], %s170
        %p172 = scmp.lt.s32.totalorder %s27, 1
        %s173 = scalar_select %p172, %s27, 1
        %s174 = smul.addr %s173, 8
        %s175 = scalar_lea.vmem %s1, %s174
        %s176 = smul.u32 %s27, 8
        loop: start=0, step=1, limit=8
        $region33: #{tpu_custom_call.1} parent=31 // loop_pre_header
          _
        $region34: #{tpu_custom_call.1} parent=31 // loop_header
          %s178 = sphi 0, %s182
          %p179 = scmp.ge.s32.totalorder %s178, 8
        $region35: #{tpu_custom_call.1} parent=31 // loop_header_branch
          %181 = sbr.rel (%p179) target = $region39
        $region36: #{tpu_custom_call.1} parent=31 // loop_body
          %s183 = sadd.s32 %s176, %s178
          %s184 = sld [smem:[#allocation5 + %s183]]
          %p185 = scmp.gt.s32.totalorder %s184, 0
          %s186 = scalar_select %p185, %s184, 0
          %p187 = scmp.lt.s32.totalorder %s186, 63
          %s188 = scalar_select %p187, %s186, 63
          %s189 = scalar_lea.hbm %s4, %s188
          %s190 = scalar_lea.vmem [#allocation2], %s178
          // Predicated region
          $region40: #{tpu_custom_call.1} parent=36 // pred_check
            _
          $region41: #{tpu_custom_call.1} parent=36 // pred_check_branch
            %192 = sbr.rel target = $region43
          $region42: #{tpu_custom_call.1} parent=36 // pred_region
            %193 = sst [smem:[#allocation10]] [#allocation9]
            %194 = sst [smem:[#allocation11]] [#allocation8]
          $region43: #{tpu_custom_call.1} parent=36 // pred_fallthru
            _
          %196 = shalt.err (0)
          %s198 = sshll.u32 %s189, 4
          %s199 = int_to_ptr.hbm [resolvable:$true] %s198
          %s200 = sshll.u32 %s190, 4
          %s201 = int_to_ptr.vmem [resolvable:$true] %s200
          %203 = dma.hbm_to_vmem [thread:$0]  %s199, 16, %s201, [#allocation3]
        $region37: #{tpu_custom_call.1} parent=31 // loop_footer
          %s182 = sadd.s32 1, %s178
        $region38: #{tpu_custom_call.1} parent=31 // loop_footer_branch
          %177 = sbr.rel target = $region34
        $region39: #{tpu_custom_call.1} parent=31 // loop_exit
          _
        loop: start=0, step=1, limit=8
        $region44: #{tpu_custom_call.1} parent=31 // loop_pre_header
          _
        $region45: #{tpu_custom_call.1} parent=31 // loop_header
          %s205 = sphi 0, %s209
          %p206 = scmp.ge.s32.totalorder %s205, 8
        $region46: #{tpu_custom_call.1} parent=31 // loop_header_branch
          %208 = sbr.rel (%p206) target = $region50
        $region47: #{tpu_custom_call.1} parent=31 // loop_body
          %s210 = smul.u32 1, 1
          %s211 = sshll.u32 %s210, 4
          %212 = dma.done [#allocation3], %s211
        $region48: #{tpu_custom_call.1} parent=31 // loop_footer
          %s209 = sadd.s32 1, %s205
        $region49: #{tpu_custom_call.1} parent=31 // loop_footer_branch
          %204 = sbr.rel target = $region45
        $region50: #{tpu_custom_call.1} parent=31 // loop_exit
          _
        %v213 = vld [vmem:[%s175] sm:$0xff]
        %v214 = vld [vmem:[%s2] sm:$0x1]
        %v215 = vld [vmem:[%s2 + $0x1] sm:$0x1]
        %vm216 = vcmp.eq.s32.totalorder %v213, 0
        %v217 = vsel %vm216, 1, 0
        %218 = vset.pattern.permute.xlu0 0
        %219 = vperm.xlu0 %218, %v217
        %v220 = vpop.permute.xlu0 %219
        %vm221 = vcmp.eq.s32.totalorder %v220, 1
        %v222 = vperm.slane %v214, 0
        %v223 = vperm.slane %v215, 0
        %v224 = vsel %vm221, %v222, %v223
        %v225 = vld [vmem:[#allocation2] sm:$0xff]
        %v226 = vadd.f32 %v225, %v224
        %v227 = vld [vmem:[%s3] sm:$0xff]
        %v228 = vadd.f32 %v226, %v227
        %229 = vst [vmem:[%s171] sm:$0xff] %v228
        %s230 = sand.u32 %s103, 1
        %s231 = scalar_lea.sflag [#allocation7], %s230
        %s232 = sand.u32 %s103, 1
        %s233 = smul.addr %s232, 8
        %s234 = scalar_lea.vmem [#allocation6], %s233
        // Predicated region
        $region51: #{tpu_custom_call.1} parent=31 // pred_check
          %p235 = pneg %p113
        $region52: #{tpu_custom_call.1} parent=31 // pred_check_branch
          %237 = sbr.rel (%p235) target = $region54
        $region53: #{tpu_custom_call.1} parent=31 // pred_region
          %239 = vsyncadd %s231, 0
          %s240 = smul.addr %s27, 8
          %s241 = scalar_lea.hbm %s5, %s240
          %s243 = sshll.u32 %s234, 4
          %s244 = int_to_ptr.vmem [resolvable:$true] %s243
          %s245 = sshll.u32 %s241, 4
          %s246 = int_to_ptr.hbm [resolvable:$true] %s245
          %248 = dma.vmem_to_hbm [thread:$0]  %s244, 128, %s246, %s231
        $region54: #{tpu_custom_call.1} parent=31 // pred_fallthru
          _
      $region32: #{tpu_custom_call.1} parent=5 // pred_fallthru
        _
      %p249 = scmp.le.s32.totalorder 2, %s22
      // Predicated region
      $region55: #{tpu_custom_call.1} parent=5 // pred_check
        %p250 = pneg %p249
      $region56: #{tpu_custom_call.1} parent=5 // pred_check_branch
        %252 = sbr.rel (%p250) target = $region58
      $region57: #{tpu_custom_call.1} parent=5 // pred_region
        %s253 = ssub.s32 %s22, 2
        // Predicated region
        $region59: #{tpu_custom_call.1} parent=57 // pred_check
          %p254 = pneg %p119
        $region60: #{tpu_custom_call.1} parent=57 // pred_check_branch
          %256 = sbr.rel (%p254) target = $region62
        $region61: #{tpu_custom_call.1} parent=57 // pred_region
          %s257 = sand.u32 %s104, 1
          %s258 = scalar_lea.sflag [#allocation7], %s257
          %s259 = sand.u32 %s104, 1
          %s260 = smul.addr %s259, 8
          %s261 = scalar_lea.vmem [#allocation6], %s260
          %263 = dma.done %s258, 128
        $region62: #{tpu_custom_call.1} parent=57 // pred_fallthru
          _
      $region58: #{tpu_custom_call.1} parent=5 // pred_fallthru
        _
    $region6: #{tpu_custom_call.1} parent=1 // loop_footer
      %s26 = sadd.s32 1, %s22
    $region7: #{tpu_custom_call.1} parent=1 // loop_footer_branch
      %21 = sbr.rel target = $region3
    $region8: #{tpu_custom_call.1} parent=1 // loop_exit
      _
    %264 = vsyncpa [#allocation7], 1
    %s265 = scalar_lea.sflag [#allocation7], 1
    %266 = vsyncpa %s265, 1
  %267 = vsyncmov [#allocation3]
  %s268 = vpop.sfrf %267
  %p269 = scmp.eq.s32.totalorder %s268, 0
  %p270 = pneg %p269
  %272 = shalt.err (%p270)

</llo_original>
